<compile_context>
chip_gen: v6e
topology: v6e:2x2x1
jax: 0.10.0
libtpu: 0.0.40
codegen_flags: <defaults>
</compile_context>

<pallas_src>
import jax
import jax.numpy as jnp
from jax import lax
from jax.experimental import pallas as pl
from jax.experimental.pallas import tpu as pltpu


def _local_norm_kernel(x_ref, o_ref):
    # x_ref: (B, TILE_D) block — full batch lives in the block, so the batch
    # reduction (mean / unbiased std over dim 0) is entirely in-kernel.
    x = x_ref[...].astype(jnp.float32)
    n = x.shape[0]
    mean = jnp.mean(x, axis=0, keepdims=True)                     # (1, TILE_D) XLU reduce
    centered = x - mean
    # torch.std default is unbiased (ddof=1). B == 1 or zero-variance features
    # produce NaN/inf exactly like torch.
    var = jnp.sum(centered * centered, axis=0, keepdims=True) / jnp.float32(n - 1)
    inv_std = lax.rsqrt(var)                                      # EUP rsqrt
    o_ref[...] = (centered * inv_std).astype(o_ref.dtype)         # VPU mul, lane-dense store


def _vmem_budget_bytes() -> int:
    # Per-generation VMEM: v5e/v6e = 128 MiB physical, v7x = 64 MiB per core.
    # Keep ~40% headroom for double-buffering slack and compiler scratch.
    try:
        info = pltpu.get_tpu_info()
        cap = int(getattr(info, "vmem_capacity_bytes", 64 * 1024 * 1024))
    except Exception:
        cap = 64 * 1024 * 1024
    return max(16 * 1024 * 1024, int(cap * 0.6))


def _pick_tile_d(B: int, D: int, itemsize: int, budget_bytes: int) -> int:
    # VMEM cost per feature lane for one grid step:
    #   input + output blocks, each double-buffered, at the input dtype -> 4 * itemsize
    #   ~two block-sized f32 temporaries inside the body (x_f32/centered) -> 2 * 4
    bytes_per_lane = B * (4 * itemsize + 2 * 4)
    lane_cap = budget_bytes // max(bytes_per_lane, 1)
    if D <= 128 or D % 128 != 0 or lane_cap < 128:
        # Small / ragged feature dim: one full-width block (block dim == full
        # array dim satisfies the (8,128) layout constraint).
        # TODO(synk): if B*D grows so large that a single full-D f32 block no
        # longer fits VMEM *and* D is not a multiple of 128, restructure to a
        # two-pass (sum/sumsq accumulate, then apply) kernel.
        return D
    # Target ~8 grid steps (DMA/compute overlap + megacore sharding) but never
    # below 512 lanes per step; clamp to the VMEM-derived lane cap.
    target = max(512, pl.cdiv(D, 8 * 128) * 128)
    tile = int(min(lane_cap, target, D))
    tile = (tile // 128) * 128
    # Largest multiple of 128 <= tile that divides D exactly (keeps every
    # block full-sized and lane-dense).
    while tile > 128 and D % tile != 0:
        tile -= 128
    if tile < 128 or D % tile != 0:
        tile = 128
    return tile


def local_normalization(latent: jax.Array) -> jax.Array:
    """(latent - latent.mean(0)) / latent.std(0)  (std unbiased, ddof=1)."""
    B, D = latent.shape
    itemsize = jnp.dtype(latent.dtype).itemsize
    budget = _vmem_budget_bytes()
    tile_d = _pick_tile_d(B, D, itemsize, budget)

    grid = (pl.cdiv(D, tile_d),)
    return pl.pallas_call(
        _local_norm_kernel,
        out_shape=jax.ShapeDtypeStruct((B, D), latent.dtype),
        grid_spec=pltpu.PrefetchScalarGridSpec(
            num_scalar_prefetch=0,
            grid=grid,
            in_specs=[pl.BlockSpec((B, tile_d), lambda j: (0, j))],
            out_specs=pl.BlockSpec((B, tile_d), lambda j: (0, j)),
        ),
        compiler_params=pltpu.CompilerParams(
            dimension_semantics=("parallel",),
            vmem_limit_bytes=budget,
        ),
        cost_estimate=pl.CostEstimate(
            flops=5 * B * D,
            transcendentals=D,
            bytes_accessed=2 * B * D * itemsize,
        ),
    )(latent)


if __name__ == "__main__":
    key = jax.random.PRNGKey(0)
    B, D = 8, 256
    latent = jax.random.normal(key, (B, D), dtype=jnp.float32) * 3.0 + 1.5

    out = local_normalization(latent)
    out = jax.block_until_ready(out)

    # Pure-JAX reference (unbiased std, matching torch.std default).
    mean_ref = jnp.mean(latent, axis=0)
    std_ref = jnp.std(latent, axis=0, ddof=1)
    ref = (latent - mean_ref[None, :]) / std_ref[None, :]

    assert out.shape == latent.shape and out.dtype == latent.dtype
    assert jnp.allclose(out, ref, atol=1e-5, rtol=1e-5), "mismatch vs reference"
    print("KERNEL_OK")
</pallas_src>

<mosaic_0001>
module attributes {stable_mosaic.version = 11 : i64} {
  func.func @_local_norm_kernel(%arg0: i32, %arg1: memref<8x256xf32, #tpu.memory_space<vmem>>, %arg2: memref<8x256xf32, #tpu.memory_space<vmem>>) attributes {dimension_semantics = [#tpu.dimension_semantics<parallel>], iteration_bounds = array<i64: 1>, scalar_prefetch = 0 : i64, scratch_operands = 0 : i64, tpu.core_type = #tpu.core_type<tc>, window_params = [{transform_indices = @transform_0, window_bounds = array<i64: 8, 256>}, {transform_indices = @transform_1, window_bounds = array<i64: 8, 256>}]} {
    %c0 = arith.constant 0 : index
    %c0_0 = arith.constant 0 : index
    %0 = vector.load %arg1[%c0, %c0_0] : memref<8x256xf32, #tpu.memory_space<vmem>>, vector<8x256xf32>
    %cst = arith.constant dense<0.000000e+00> : vector<256xf32>
    %1 = vector.multi_reduction <add>, %0, %cst [0] : vector<8x256xf32> to vector<256xf32>
    %2 = vector.shape_cast %1 : vector<256xf32> to vector<1x256xf32>
    %cst_1 = arith.constant 8.000000e+00 : f32
    %3 = vector.broadcast %cst_1 : f32 to vector<1x256xf32>
    %4 = arith.divf %2, %3 : vector<1x256xf32>
    %5 = vector.broadcast %4 : vector<1x256xf32> to vector<8x256xf32>
    %6 = arith.subf %0, %5 : vector<8x256xf32>
    %7 = arith.mulf %6, %6 : vector<8x256xf32>
    %cst_2 = arith.constant dense<0.000000e+00> : vector<256xf32>
    %8 = vector.multi_reduction <add>, %7, %cst_2 [0] : vector<8x256xf32> to vector<256xf32>
    %9 = vector.shape_cast %8 : vector<256xf32> to vector<1x256xf32>
    %cst_3 = arith.constant 7.000000e+00 : f32
    %10 = vector.broadcast %cst_3 : f32 to vector<1x256xf32>
    %11 = arith.divf %9, %10 : vector<1x256xf32>
    %12 = math.rsqrt %11 : vector<1x256xf32>
    %13 = vector.broadcast %12 : vector<1x256xf32> to vector<8x256xf32>
    %14 = arith.mulf %6, %13 : vector<8x256xf32>
    %c0_4 = arith.constant 0 : index
    %c0_5 = arith.constant 0 : index
    %15 = vector.load %arg2[%c0_4, %c0_5] : memref<8x256xf32, #tpu.memory_space<vmem>>, vector<8x256xf32>
    tpu.vector_store %arg2[%c0_4, %c0_5], %14 {strides = array<i32>} : memref<8x256xf32, #tpu.memory_space<vmem>>, vector<8x256xf32>,
    return
  }
  func.func @transform_0(%arg0: i32) -> (i32, i32) {
    %c0_i32 = arith.constant 0 : i32
    %c0_i32_0 = arith.constant 0 : i32
    return %c0_i32, %arg0 : i32, i32
  }
  func.func @transform_1(%arg0: i32) -> (i32, i32) {
    %c0_i32 = arith.constant 0 : i32
    %c0_i32_0 = arith.constant 0 : i32
    return %c0_i32, %arg0 : i32, i32
  }
}

</mosaic_0001>

<llo_original>
// kernel: tpu_custom_call.1
$region0: #{tpu_custom_call.1}
  #allocation0 [shape = 'u32[]', space=smem, size = 0x4, offset = 0x4, fixed_abs, tag = 'smem constant byte address 0x4 - core index']
  #allocation1 [shape = 'u32[144,128]{1,0:T(1,128)}', space=vmem, size = 0x12000, scoped, tag = 'internal scratch']
  %s0 = inlined_call_operand.hbm [shape: f32[8,256], index: 0, kind: input, shape index: {}]
  %s1 = inlined_call_operand.hbm [shape: f32[8,256], index: 1, kind: output, shape index: {}]
  %s2 = sld [smem:[#allocation0]]
  $region18: #{tpu_custom_call.1} parent=0
    _
  %s4 = ssub.s32 1, %s2
  %s5 = scalar_select 0, %s4, %s2
  $region1: #{tpu_custom_call.1} parent=0
    #allocation2 [shape = 'u8[8192]{0}', space=vmem, size = 0x2000, scoped, tag = 'input window, operand 0, single buffered']
    #allocation3 [shape = 's32[1]{0}', space=sflag, size = 0x4, scoped, tag = 'scoped memory for tpu_custom_call.1']
    #allocation4 [shape = 's32[1]{0}', space=sflag, size = 0x4, scoped, tag = 'scoped memory for tpu_custom_call.1']
    #allocation5 [shape = 'u8[8192]{0}', space=vmem, size = 0x2000, scoped, tag = 'output window, operand 0, single buffered']
    %6 = vsyncpa [#allocation3], 0
    %7 = vsyncpa [#allocation4], 0
    // Predicated region
    $region2: #{tpu_custom_call.1} parent=1 // pred_check
      _
    $region3: #{tpu_custom_call.1} parent=1 // pred_check_branch
      %9 = sbr.rel (0) target = $region5
    $region4: #{tpu_custom_call.1} parent=1 // pred_region
      %s11 = ssub.s32 256, 256
      %12 = vsyncadd [#allocation3], %s11
      %s14 = sshll.u32 [#allocation2], 4
      %s15 = int_to_ptr.vmem [resolvable:$true] %s14
      %17 = dma.hbm_to_vmem [thread:$0]  %s0, 256, %s15, [#allocation3]
    $region5: #{tpu_custom_call.1} parent=1 // pred_fallthru
      _
    // Predicated region
    $region6: #{tpu_custom_call.1} parent=1 // pred_check
      _
    $region7: #{tpu_custom_call.1} parent=1 // pred_check_branch
      %19 = sbr.rel (0) target = $region9
    $region8: #{tpu_custom_call.1} parent=1 // pred_region
      %20 = dma.done [#allocation3], 256
    $region9: #{tpu_custom_call.1} parent=1 // pred_fallthru
      _
    %v21 = vld [vmem:[#allocation2] sm:$0xff]
    %v22 = vld [vmem:[#allocation2 + $0x8] sm:$0xff]
    %v23 = vrot.slane %v21, 4
    %v24 = vadd.f32 %v21, %v23
    %v25 = vrot.slane %v24, 2
    %v26 = vadd.f32 %v24, %v25
    %v27 = vrot.slane %v26, 1
    %v28 = vadd.f32 %v26, %v27
    %v29 = vrot.slane %v22, 4
    %v30 = vadd.f32 %v22, %v29
    %v31 = vrot.slane %v30, 2
    %v32 = vadd.f32 %v30, %v31
    %v33 = vrot.slane %v32, 1
    %v34 = vadd.f32 %v32, %v33
    %v35 = vrcp.pop 8.0
    %v36 = vmul.f32 %v28, %v35
    %v37 = vmul.f32 %v34, %v35
    %v38 = vsub.f32 %v21, %v36
    %v39 = vsub.f32 %v22, %v37
    %v40 = vmul.f32 %v38, %v38
    %v41 = vmul.f32 %v39, %v39
    %v42 = vrot.slane %v40, 4
    %v43 = vadd.f32 %v40, %v42
    %v44 = vrot.slane %v43, 2
    %v45 = vadd.f32 %v43, %v44
    %v46 = vrot.slane %v45, 1
    %v47 = vadd.f32 %v45, %v46
    %v48 = vrot.slane %v41, 4
    %v49 = vadd.f32 %v41, %v48
    %v50 = vrot.slane %v49, 2
    %v51 = vadd.f32 %v49, %v50
    %v52 = vrot.slane %v51, 1
    %v53 = vadd.f32 %v51, %v52
    %v54 = vrcp.pop 7.0
    %v55 = vmul.f32 %v47, %v54
    %v56 = vmul.f32 %v53, %v54
    %v57 = vrsqrt.pop %v55
    %v58 = vrsqrt.pop %v56
    %v59 = vmul.f32 %v38, %v57
    %v60 = vmul.f32 %v39, %v58
    %61 = vst [vmem:[#allocation5] sm:$0xff] %v59
    %62 = vst [vmem:[#allocation5 + $0x8] sm:$0xff] %v60
    // Predicated region
    $region10: #{tpu_custom_call.1} parent=1 // pred_check
      _
    $region11: #{tpu_custom_call.1} parent=1 // pred_check_branch
      %64 = sbr.rel (0) target = $region13
    $region12: #{tpu_custom_call.1} parent=1 // pred_region
      %s66 = ssub.s32 256, 256
      %67 = vsyncadd [#allocation4], %s66
      %s69 = sshll.u32 [#allocation5], 4
      %s70 = int_to_ptr.vmem [resolvable:$true] %s69
      %72 = dma.vmem_to_hbm [thread:$0]  %s70, 256, %s1, [#allocation4]
    $region13: #{tpu_custom_call.1} parent=1 // pred_fallthru
      _
    // Predicated region
    $region14: #{tpu_custom_call.1} parent=1 // pred_check
      _
    $region15: #{tpu_custom_call.1} parent=1 // pred_check_branch
      %74 = sbr.rel (0) target = $region17
    $region16: #{tpu_custom_call.1} parent=1 // pred_region
      %75 = dma.done [#allocation4], 256
    $region17: #{tpu_custom_call.1} parent=1 // pred_fallthru
      _
    %76 = vsyncpa [#allocation3], 1
    %77 = vsyncpa [#allocation4], 1

</llo_original>
